<compile_context>
chip_gen: v6e
topology: v6e:2x2x1
jax: 0.10.0
libtpu: 0.0.40
codegen_flags: <defaults>
</compile_context>

<pallas_src>
import functools

import jax
import jax.numpy as jnp
import numpy as np
from jax.experimental import pallas as pl
from jax.experimental.pallas import tpu as pltpu


def _make_kernel(obj_thr: float, soft: bool):
    def kernel(anchors_ref, emb_ref, esq_ref, ann_ref, w_ref,
               out_sum_ref, out_cnt_ref):
        a_tile = pl.program_id(2)

        # Output blocks are resident across the (arbitrary, innermost) anchor-tile
        # axis and double as accumulators: zero them on the first tile of each
        # (image, half) block.
        @pl.when(a_tile == 0)
        def _():
            out_sum_ref[...] = jnp.zeros_like(out_sum_ref)
            out_cnt_ref[...] = jnp.zeros_like(out_cnt_ref)

        anc = anchors_ref[0]          # (4, TA)  f32, anchors on lanes
        emb = emb_ref[0]              # (E, TA)  bf16, anchors on lanes
        esq = esq_ref[0]              # (1, TA)  f32, hoisted ||e||^2
        ann = ann_ref[0]              # (M, 5)   f32
        w_t = w_ref[...]              # (C, E)   bf16, unit-norm class rows

        TA = anc.shape[1]
        M = ann.shape[0]
        C = w_t.shape[0]

        ax1 = anc[0:1, :]
        ay1 = anc[1:2, :]
        ax2 = anc[2:3, :]
        ay2 = anc[3:4, :]
        gx1 = ann[:, 0:1]
        gy1 = ann[:, 1:2]
        gx2 = ann[:, 2:3]
        gy2 = ann[:, 3:4]
        glab = ann[:, 4:5]
        valid = glab != -1.0                                   # (M, 1)

        # --- IoU (M, TA); invalid annotation rows forced to -1 so they never win ---
        iw = jnp.maximum(jnp.minimum(ax2, gx2) - jnp.maximum(ax1, gx1), 0.0)
        ih = jnp.maximum(jnp.minimum(ay2, gy2) - jnp.maximum(ay1, gy1), 0.0)
        inter = iw * ih
        area_a = (ax2 - ax1) * (ay2 - ay1)                     # (1, TA)
        area_g = (gx2 - gx1) * (gy2 - gy1)                     # (M, 1)
        union = jnp.maximum(area_a + area_g - inter, 1e-8)
        # Exact divide on purpose: approx reciprocal (~2^-12 rel. err.) could flip
        # anchors sitting exactly on the selection threshold or on argmax ties.
        iou = jnp.where(valid, inter / union, -1.0)            # (M, TA)

        # --- assignment: max IoU + label of the first maximal annotation ---
        iou_max = jnp.max(iou, axis=0, keepdims=True)          # (1, TA)
        midx = jax.lax.broadcasted_iota(jnp.int32, (M, TA), 0)
        glab_i = glab.astype(jnp.int32)                        # (M, 1)
        # pack (annotation index, label): min picks first argmax, % C recovers label
        packed = jnp.where(iou == iou_max, midx * C + glab_i, M * C)
        labels = jnp.min(packed, axis=0, keepdims=True) % C    # (1, TA) int32
        selected = (iou_max >= obj_thr).astype(jnp.float32)    # (1, TA)

        # --- cosine similarity with the assigned (unit-norm) class vector -------
        scores = jnp.dot(w_t, emb, preferred_element_type=jnp.float32)   # (C, TA)
        cidx = jax.lax.broadcasted_iota(jnp.int32, (C, TA), 0)
        onehot = cidx == labels                                           # (C, TA)
        dots = jnp.sum(jnp.where(onehot, scores, 0.0), axis=0, keepdims=True)   # (1, TA)

        inv = jax.lax.rsqrt(jnp.where(esq > 0.0, esq, 1.0))    # EUP rsqrt, (1, TA)
        cos = dots * inv                   # dots == 0 whenever ||e|| or ||w|| == 0
        per_anchor = -cos
        if soft:
            per_anchor = per_anchor * iou_max
        per_anchor = (per_anchor + 1.0) * 0.5                             # (1, TA)

        # --- lane-shaped element-wise accumulation (no per-tile XLU reduce) -----
        out_sum_ref[0, 0:1, :] = out_sum_ref[0, 0:1, :] + per_anchor * selected
        out_cnt_ref[0, 0:1, :] = out_cnt_ref[0, 0:1, :] + selected

    return kernel


def _vmem_budget_bytes(E, C, M, ta):
    """Rough per-step VMEM usage (double-buffered streams + intermediates)."""
    m_pad = ((M + 7) // 8) * 8
    inputs = 2 * ta * (E * 2 + 4 * 4 + 4)              # emb(bf16) + anchors + esq
    resident = 2 * (C * E * 2 + m_pad * 128 * 4)       # class weights + annotations tile
    outputs = 2 * 2 * 8 * ta * 4                       # two (8, ta) f32 output blocks
    temps = (10 * M + 4 * C + 16) * ta * 4             # (M,TA)/(C,TA)/(1,TA) f32 temps
    est = inputs + resident + outputs + temps
    # generous headroom, but stay well under v7x's 64 MiB physical VMEM
    return max(min(int(est * 1.5) + (8 << 20), 56 << 20), 24 << 20)


@functools.partial(jax.jit, static_argnames=("obj_thr", "soft", "tile_a"))
def _ccs_loss_call(anchors_t, emb_t, esq, annotations, w_t, *,
                   obj_thr, soft, tile_a):
    B, _, A = anchors_t.shape
    E = emb_t.shape[1]
    M = annotations.shape[1]
    C = w_t.shape[0]

    ta = tile_a
    n_a = A // ta
    # Second parallel axis over anchor halves: keeps both v7x TensorCores busy
    # even at per-device batch 1-2; no-op on single-TC v5e/v6e.
    n_par = 2 if (n_a % 2 == 0 and n_a >= 2) else 1
    n_app = n_a // n_par

    kernel = _make_kernel(obj_thr, soft)

    def tile_map(b, p, a):          # anchor-axis tiles, shared by anchors/emb/esq
        return (b, 0, p * n_app + a)

    grid_spec = pltpu.PrefetchScalarGridSpec(
        num_scalar_prefetch=0,
        grid=(B, n_par, n_app),
        in_specs=[
            pl.BlockSpec((1, 4, ta), tile_map),                 # anchors (lanes = A)
            pl.BlockSpec((1, E, ta), tile_map),                 # embeddings (lanes = A)
            # NOTE(v5e): if profiling shows exposed embedding DMA at large ta,
            # add pipeline_mode=pl.Buffered(3) to the embeddings spec above.
            pl.BlockSpec((1, 1, ta), tile_map),                 # ||e||^2 (lanes = A)
            pl.BlockSpec((1, M, 5), lambda b, p, a: (b, 0, 0)),  # annotations (per image)
            pl.BlockSpec((C, E), lambda b, p, a: (0, 0)),        # unit class weights
        ],
        out_specs=[
            pl.BlockSpec((1, 8, ta), lambda b, p, a: (b, p, 0)),  # per-(image,half) sums
            pl.BlockSpec((1, 8, ta), lambda b, p, a: (b, p, 0)),  # per-(image,half) counts
        ],
    )
    out_sum, out_cnt = pl.pallas_call(
        kernel,
        out_shape=(jax.ShapeDtypeStruct((B, n_par * 8, ta), jnp.float32),
                   jax.ShapeDtypeStruct((B, n_par * 8, ta), jnp.float32)),
        grid_spec=grid_spec,
        compiler_params=pltpu.CompilerParams(
            dimension_semantics=("parallel", "parallel", "arbitrary"),
            vmem_limit_bytes=_vmem_budget_bytes(E, C, M, ta),
        ),
    )(anchors_t, emb_t, esq, annotations, w_t)

    # Only row 0 of each (8, ta) block is non-zero; sum is over halves + lanes.
    sums = jnp.sum(out_sum, axis=(1, 2))                        # (B,)
    cnts = jnp.sum(out_cnt, axis=(1, 2))                        # (B,)
    per_img = jnp.where(cnts > 0.0, sums / jnp.maximum(cnts, 1.0), 0.0)
    return jnp.mean(per_img)


def ccs_loss_pallas(anchors, embeddings, weights, annotations,
                    iou_thresholds=None, soft=False, tile_a=1024,
                    matmul_dtype=jnp.bfloat16):
    """Pallas equivalent of CCSLoss.forward. Returns a scalar f32 loss.

    anchors:     (B, A, 4)   embeddings: (B, A, E)
    weights:     (E, C)      annotations: (B, M, 5), padded rows have label == -1
    """
    if iou_thresholds is None:
        iou_thresholds = {"background": 0.4, "object": 0.5}
    obj_thr = float(iou_thresholds["object"])
    # Padded (zero-area) anchors get IoU exactly 0; they must never clear the threshold.
    assert obj_thr > 0.0, "iou_thresholds['object'] must be > 0 (anchor padding safety)"

    anchors = anchors.astype(jnp.float32)
    annotations = annotations.astype(jnp.float32)
    weights_f32 = weights.astype(jnp.float32)

    B, A, _ = anchors.shape
    # Anchor tile: multiple of 256 so the matmul N dim fills the 256-wide MXU on
    # v6e/v7x; large default amortizes per-grid-step overhead.
    ta = max(256, (int(tile_a) // 256) * 256)
    ta = min(ta, ((A + 255) // 256) * 256)
    a_pad = ((A + ta - 1) // ta) * ta
    if a_pad != A:
        pad = a_pad - A
        # padded anchors are zero-area boxes -> IoU 0 (< object threshold) -> never selected
        anchors = jnp.pad(anchors, ((0, 0), (0, pad), (0, 0)))
        embeddings = jnp.pad(embeddings, ((0, 0), (0, pad), (0, 0)))

    # Layout glue: anchor axis on the lane (minor) dimension.
    # TODO(synk): have the upstream head emit embeddings as (B, E, A) bf16 (and
    # anchors as (B, 4, A)) so this transpose / extra HBM round trip disappears.
    anchors_t = jnp.transpose(anchors, (0, 2, 1))                       # (B, 4, A)
    emb_f32 = embeddings.astype(jnp.float32)
    emb_t = jnp.transpose(emb_f32, (0, 2, 1)).astype(matmul_dtype)      # (B, E, A)
    # Hoisted per-anchor squared norm (f32, matches the PyTorch norm of the
    # original embedding even when the matmul operand is bf16).
    esq = jnp.sum(emb_f32 * emb_f32, axis=-1)[:, None, :]               # (B, 1, A)

    # Pre-normalized class weights; zero-norm columns forced to all-zero so the
    # in-kernel dot stays 0 (cos = 0 fallback preserved).
    wnorm = jnp.sqrt(jnp.sum(weights_f32 * weights_f32, axis=0, keepdims=True))  # (1, C)
    w_unit = jnp.where(wnorm > 0.0, weights_f32 / jnp.maximum(wnorm, 1e-30), 0.0)
    w_t = jnp.transpose(w_unit, (1, 0)).astype(matmul_dtype)            # (C, E)

    return _ccs_loss_call(anchors_t, emb_t, esq, annotations, w_t,
                          obj_thr=obj_thr, soft=bool(soft), tile_a=ta)


def ccs_loss_reference(anchors, embeddings, weights, annotations,
                       obj_thr=0.5, soft=False):
    """Plain NumPy reference mirroring the PyTorch loop (for verification)."""
    anchors = np.asarray(anchors, np.float32)
    embeddings = np.asarray(embeddings, np.float32)
    weights = np.asarray(weights, np.float32)
    annotations = np.asarray(annotations, np.float32)
    losses = []
    for b in range(anchors.shape[0]):
        ann = annotations[b]
        ann = ann[ann[:, -1] != -1]
        if ann.shape[0] == 0:
            losses.append(0.0)
            continue
        a = anchors[b]
        iw = np.clip(np.minimum(a[:, None, 2], ann[None, :, 2]) -
                     np.maximum(a[:, None, 0], ann[None, :, 0]), 0, None)
        ih = np.clip(np.minimum(a[:, None, 3], ann[None, :, 3]) -
                     np.maximum(a[:, None, 1], ann[None, :, 1]), 0, None)
        inter = iw * ih
        area_a = (a[:, 2] - a[:, 0]) * (a[:, 3] - a[:, 1])
        area_g = (ann[:, 2] - ann[:, 0]) * (ann[:, 3] - ann[:, 1])
        union = np.maximum(area_a[:, None] + area_g[None, :] - inter, 1e-8)
        iou = inter / union
        iou_max = iou.max(1)
        iou_arg = iou.argmax(1)
        sel = iou_max >= obj_thr
        if sel.sum() == 0:
            losses.append(0.0)
            continue
        labels = ann[iou_arg, 4].astype(np.int64)
        e = embeddings[b][sel]
        wv = weights[:, labels[sel]].T
        dot = (e * wv).sum(1)
        loss = -dot / np.linalg.norm(e, axis=1) / np.linalg.norm(wv, axis=1)
        if soft:
            loss = loss * iou_max[sel]
        loss = (loss + 1.0) / 2.0
        losses.append(loss.mean())
    return float(np.mean(losses))


if __name__ == "__main__":
    B, A, E, C, M = 2, 1024, 32, 4, 8
    TILE_A = 256  # 4 anchor tiles -> grid (B, 2 parallel halves, 2 arbitrary tiles)

    key = jax.random.PRNGKey(0)
    k1, k2, k3, k4, k5, k6, k7 = jax.random.split(key, 7)

    # anchors: random boxes
    axy = jax.random.uniform(k1, (B, A, 2), minval=0.0, maxval=80.0)
    awh = jax.random.uniform(k2, (B, A, 2), minval=8.0, maxval=40.0)
    anchors = jnp.concatenate([axy, axy + awh], axis=-1)

    # annotations: random boxes + labels, padded with -1
    gxy = jax.random.uniform(k3, (B, M, 2), minval=0.0, maxval=80.0)
    gwh = jax.random.uniform(k4, (B, M, 2), minval=8.0, maxval=40.0)
    glab = jax.random.randint(k5, (B, M, 1), 0, C).astype(jnp.float32)
    annotations = jnp.concatenate([gxy, gxy + gwh, glab], axis=-1)
    n_valid = jnp.array([5, 3])  # valid objects per image
    pad = (jnp.arange(M)[None, :] >= n_valid[:, None])[..., None]
    annotations = jnp.where(pad, -1.0, annotations)

    # plant matching anchors in every anchor tile and BOTH parallel halves
    anchors = anchors.at[:, 0:4, :].set(annotations[:, 0:4, :4])
    anchors = anchors.at[:, 300:303, :].set(annotations[:, 0:3, :4])
    anchors = anchors.at[:, 600:603, :].set(annotations[:, 0:3, :4])
    anchors = anchors.at[:, 900:902, :].set(annotations[:, 0:2, :4])

    embeddings = jax.random.normal(k6, (B, A, E), dtype=jnp.float32)
    weights = jax.random.normal(k7, (E, C), dtype=jnp.float32) * 0.1

    # feed bf16-rounded matmul operands to both paths so the numeric check is tight
    emb_bf = embeddings.astype(jnp.bfloat16)
    w_bf = weights.astype(jnp.bfloat16)

    loss = ccs_loss_pallas(anchors, emb_bf, w_bf, annotations, tile_a=TILE_A)
    loss = jax.block_until_ready(loss)

    ref = ccs_loss_reference(anchors,
                             np.asarray(emb_bf.astype(jnp.float32)),
                             np.asarray(w_bf.astype(jnp.float32)),
                             annotations)
    np.testing.assert_allclose(float(loss), ref, rtol=5e-3, atol=1e-3)

    print("KERNEL_OK")
</pallas_src>

<mosaic_0001>
module attributes {stable_mosaic.version = 11 : i64} {
  func.func @kernel(%arg0: i32, %arg1: i32, %arg2: i32, %arg3: memref<1x4x256xf32, #tpu.memory_space<vmem>>, %arg4: memref<1x32x256xbf16, #tpu.memory_space<vmem>>, %arg5: memref<1x1x256xf32, #tpu.memory_space<vmem>>, %arg6: memref<1x8x5xf32, #tpu.memory_space<vmem>>, %arg7: memref<4x32xbf16, #tpu.memory_space<vmem>>, %arg8: memref<1x8x256xf32, #tpu.memory_space<vmem>>, %arg9: memref<1x8x256xf32, #tpu.memory_space<vmem>>) attributes {dimension_semantics = [#tpu.dimension_semantics<parallel>, #tpu.dimension_semantics<parallel>, #tpu.dimension_semantics<arbitrary>], iteration_bounds = array<i64: 2, 2, 2>, scalar_prefetch = 0 : i64, scratch_operands = 0 : i64, tpu.core_type = #tpu.core_type<tc>, window_params = [{transform_indices = @transform_0, window_bounds = array<i64: 1, 4, 256>}, {transform_indices = @transform_1, window_bounds = array<i64: 1, 32, 256>}, {transform_indices = @transform_2, window_bounds = array<i64: 1, 1, 256>}, {transform_indices = @transform_3, window_bounds = array<i64: 1, 8, 5>}, {pipeline_mode = #tpu.pipeline_mode<synchronous>, transform_indices = @transform_4, window_bounds = array<i64: 4, 32>}, {transform_indices = @transform_5, window_bounds = array<i64: 1, 8, 256>}, {transform_indices = @transform_6, window_bounds = array<i64: 1, 8, 256>}]} {
    %c0_i32 = arith.constant 0 : i32
    %0 = arith.cmpi eq, %arg2, %c0_i32 : i32
    %1 = arith.extui %0 : i1 to i32
    %c0_i32_0 = arith.constant 0 : i32
    %2 = arith.cmpi ne, %1, %c0_i32_0 : i32
    scf.if %2 {
      %cst_46 = arith.constant 0.000000e+00 : f32
      %126 = vector.broadcast %cst_46 : f32 to vector<1x8x256xf32>
      %c0_47 = arith.constant 0 : index
      %c0_48 = arith.constant 0 : index
      %c0_49 = arith.constant 0 : index
      %127 = vector.load %arg8[%c0_47, %c0_48, %c0_49] : memref<1x8x256xf32, #tpu.memory_space<vmem>>, vector<1x8x256xf32>
      tpu.vector_store %arg8[%c0_47, %c0_48, %c0_49], %126 {strides = array<i32>} : memref<1x8x256xf32, #tpu.memory_space<vmem>>, vector<1x8x256xf32>,
      %cst_50 = arith.constant 0.000000e+00 : f32
      %128 = vector.broadcast %cst_50 : f32 to vector<1x8x256xf32>
      %c0_51 = arith.constant 0 : index
      %c0_52 = arith.constant 0 : index
      %c0_53 = arith.constant 0 : index
      %129 = vector.load %arg9[%c0_51, %c0_52, %c0_53] : memref<1x8x256xf32, #tpu.memory_space<vmem>>, vector<1x8x256xf32>
      tpu.vector_store %arg9[%c0_51, %c0_52, %c0_53], %128 {strides = array<i32>} : memref<1x8x256xf32, #tpu.memory_space<vmem>>, vector<1x8x256xf32>,
    } else {
    }
    %c0 = arith.constant 0 : index
    %c0_1 = arith.constant 0 : index
    %c0_2 = arith.constant 0 : index
    %3 = vector.load %arg3[%c0, %c0_1, %c0_2] : memref<1x4x256xf32, #tpu.memory_space<vmem>>, vector<1x4x256xf32>
    %4 = vector.shape_cast %3 : vector<1x4x256xf32> to vector<4x256xf32>
    %c0_3 = arith.constant 0 : index
    %c0_4 = arith.constant 0 : index
    %c0_5 = arith.constant 0 : index
    %5 = vector.load %arg4[%c0_3, %c0_4, %c0_5] : memref<1x32x256xbf16, #tpu.memory_space<vmem>>, vector<1x32x256xbf16>
    %6 = vector.shape_cast %5 : vector<1x32x256xbf16> to vector<32x256xbf16>
    %c0_6 = arith.constant 0 : index
    %c0_7 = arith.constant 0 : index
    %c0_8 = arith.constant 0 : index
    %7 = vector.load %arg5[%c0_6, %c0_7, %c0_8] : memref<1x1x256xf32, #tpu.memory_space<vmem>>, vector<1x1x256xf32>
    %8 = vector.shape_cast %7 : vector<1x1x256xf32> to vector<1x256xf32>
    %c0_9 = arith.constant 0 : index
    %c0_10 = arith.constant 0 : index
    %c0_11 = arith.constant 0 : index
    %9 = vector.load %arg6[%c0_9, %c0_10, %c0_11] : memref<1x8x5xf32, #tpu.memory_space<vmem>>, vector<1x8x5xf32>
    %10 = vector.shape_cast %9 : vector<1x8x5xf32> to vector<8x5xf32>
    %c0_12 = arith.constant 0 : index
    %c0_13 = arith.constant 0 : index
    %11 = vector.load %arg7[%c0_12, %c0_13] : memref<4x32xbf16, #tpu.memory_space<vmem>>, vector<4x32xbf16>
    %12 = vector.extract_strided_slice %4 {offsets = [0, 0], sizes = [1, 256], strides = [1, 1]} : vector<4x256xf32> to vector<1x256xf32>
    %13 = vector.extract_strided_slice %4 {offsets = [1, 0], sizes = [1, 256], strides = [1, 1]} : vector<4x256xf32> to vector<1x256xf32>
    %14 = vector.extract_strided_slice %4 {offsets = [2, 0], sizes = [1, 256], strides = [1, 1]} : vector<4x256xf32> to vector<1x256xf32>
    %15 = vector.extract_strided_slice %4 {offsets = [3, 0], sizes = [1, 256], strides = [1, 1]} : vector<4x256xf32> to vector<1x256xf32>
    %16 = vector.extract_strided_slice %10 {offsets = [0, 0], sizes = [8, 1], strides = [1, 1]} : vector<8x5xf32> to vector<8x1xf32>
    %17 = vector.extract_strided_slice %10 {offsets = [0, 1], sizes = [8, 1], strides = [1, 1]} : vector<8x5xf32> to vector<8x1xf32>
    %18 = vector.extract_strided_slice %10 {offsets = [0, 2], sizes = [8, 1], strides = [1, 1]} : vector<8x5xf32> to vector<8x1xf32>
    %19 = vector.extract_strided_slice %10 {offsets = [0, 3], sizes = [8, 1], strides = [1, 1]} : vector<8x5xf32> to vector<8x1xf32>
    %20 = vector.extract_strided_slice %10 {offsets = [0, 4], sizes = [8, 1], strides = [1, 1]} : vector<8x5xf32> to vector<8x1xf32>
    %cst = arith.constant -1.000000e+00 : f32
    %21 = vector.broadcast %cst : f32 to vector<8x1xf32>
    %22 = arith.cmpf one, %20, %21 : vector<8x1xf32>
    %23 = vector.broadcast %14 : vector<1x256xf32> to vector<8x256xf32>
    %24 = vector.broadcast %18 : vector<8x1xf32> to vector<8x256xf32>
    %25 = arith.minimumf %23, %24 : vector<8x256xf32>
    %26 = vector.broadcast %12 : vector<1x256xf32> to vector<8x256xf32>
    %27 = vector.broadcast %16 : vector<8x1xf32> to vector<8x256xf32>
    %28 = arith.maximumf %26, %27 : vector<8x256xf32>
    %29 = arith.subf %25, %28 : vector<8x256xf32>
    %cst_14 = arith.constant 0.000000e+00 : f32
    %30 = vector.broadcast %cst_14 : f32 to vector<8x256xf32>
    %31 = arith.maximumf %29, %30 : vector<8x256xf32>
    %32 = vector.broadcast %15 : vector<1x256xf32> to vector<8x256xf32>
    %33 = vector.broadcast %19 : vector<8x1xf32> to vector<8x256xf32>
    %34 = arith.minimumf %32, %33 : vector<8x256xf32>
    %35 = vector.broadcast %13 : vector<1x256xf32> to vector<8x256xf32>
    %36 = vector.broadcast %17 : vector<8x1xf32> to vector<8x256xf32>
    %37 = arith.maximumf %35, %36 : vector<8x256xf32>
    %38 = arith.subf %34, %37 : vector<8x256xf32>
    %cst_15 = arith.constant 0.000000e+00 : f32
    %39 = vector.broadcast %cst_15 : f32 to vector<8x256xf32>
    %40 = arith.maximumf %38, %39 : vector<8x256xf32>
    %41 = arith.mulf %31, %40 : vector<8x256xf32>
    %42 = arith.subf %14, %12 : vector<1x256xf32>
    %43 = arith.subf %15, %13 : vector<1x256xf32>
    %44 = arith.mulf %42, %43 : vector<1x256xf32>
    %45 = arith.subf %18, %16 : vector<8x1xf32>
    %46 = arith.subf %19, %17 : vector<8x1xf32>
    %47 = arith.mulf %45, %46 : vector<8x1xf32>
    %48 = vector.broadcast %44 : vector<1x256xf32> to vector<8x256xf32>
    %49 = vector.broadcast %47 : vector<8x1xf32> to vector<8x256xf32>
    %50 = arith.addf %48, %49 : vector<8x256xf32>
    %51 = arith.subf %50, %41 : vector<8x256xf32>
    %cst_16 = arith.constant 9.99999993E-9 : f32
    %52 = vector.broadcast %cst_16 : f32 to vector<8x256xf32>
    %53 = arith.maximumf %51, %52 : vector<8x256xf32>
    %54 = arith.divf %41, %53 : vector<8x256xf32>
    %cst_17 = arith.constant -1.000000e+00 : f32
    %55 = vector.shape_cast %22 : vector<8x1xi1> to vector<8x1xi1>
    %56 = vector.broadcast %55 : vector<8x1xi1> to vector<8x256xi1>
    %57 = vector.broadcast %cst_17 : f32 to vector<8x256xf32>
    %58 = arith.select %56, %54, %57 : vector<8x256xi1>, vector<8x256xf32>
    %cst_18 = arith.constant dense<0xFF800000> : vector<256xf32>
    %59 = vector.multi_reduction <maximumf>, %58, %cst_18 [0] : vector<8x256xf32> to vector<256xf32>
    %60 = vector.shape_cast %59 : vector<256xf32> to vector<1x256xf32>
    %61 = tpu.iota {dimensions = array<i32: 0>} : vector<8x256xi32>
    %62 = arith.fptosi %20 : vector<8x1xf32> to vector<8x1xi32>
    %63 = vector.broadcast %60 : vector<1x256xf32> to vector<8x256xf32>
    %64 = arith.cmpf oeq, %58, %63 : vector<8x256xf32>
    %c4_i32 = arith.constant 4 : i32
    %65 = vector.broadcast %c4_i32 : i32 to vector<8x256xi32>
    %66 = arith.muli %61, %65 : vector<8x256xi32>
    %67 = vector.broadcast %62 : vector<8x1xi32> to vector<8x256xi32>
    %68 = arith.addi %66, %67 : vector<8x256xi32>
    %c32_i32 = arith.constant 32 : i32
    %69 = vector.broadcast %c32_i32 : i32 to vector<8x256xi32>
    %70 = arith.select %64, %68, %69 : vector<8x256xi1>, vector<8x256xi32>
    %cst_19 = arith.constant dense<2147483647> : vector<256xi32>
    %71 = vector.multi_reduction <minsi>, %70, %cst_19 [0] : vector<8x256xi32> to vector<256xi32>
    %72 = vector.shape_cast %71 : vector<256xi32> to vector<1x256xi32>
    %c4_i32_20 = arith.constant 4 : i32
    %c0_i32_21 = arith.constant 0 : i32
    %73 = arith.cmpi eq, %c4_i32_20, %c0_i32_21 : i32
    %c1_i32 = arith.constant 1 : i32
    %74 = arith.select %73, %c1_i32, %c4_i32_20 : i32
    %75 = vector.broadcast %74 : i32 to vector<1x256xi32>
    %76 = arith.remsi %72, %75 : vector<1x256xi32>
    %c0_i32_22 = arith.constant 0 : i32
    %77 = vector.broadcast %c0_i32_22 : i32 to vector<1x256xi32>
    %78 = arith.cmpi ne, %76, %77 : vector<1x256xi32>
    %c0_i32_23 = arith.constant 0 : i32
    %79 = vector.broadcast %c0_i32_23 : i32 to vector<1x256xi32>
    %80 = arith.cmpi slt, %76, %79 : vector<1x256xi32>
    %c0_i32_24 = arith.constant 0 : i32
    %81 = arith.cmpi slt, %74, %c0_i32_24 : i32
    %82 = vector.broadcast %81 : i1 to vector<1x256xi1>
    %83 = vector.broadcast %82 : vector<1x256xi1> to vector<1x256xi1>
    %84 = arith.xori %80, %83 : vector<1x256xi1>
    %85 = arith.andi %84, %78 : vector<1x256xi1>
    %86 = vector.broadcast %74 : i32 to vector<1x256xi32>
    %87 = arith.addi %76, %86 : vector<1x256xi32>
    %88 = arith.select %85, %87, %76 : vector<1x256xi1>, vector<1x256xi32>
    %cst_25 = arith.constant 5.000000e-01 : f32
    %89 = vector.broadcast %cst_25 : f32 to vector<1x256xf32>
    %90 = arith.cmpf oge, %60, %89 : vector<1x256xf32>
    %91 = arith.extui %90 : vector<1x256xi1> to vector<1x256xi32>
    %92 = arith.sitofp %91 : vector<1x256xi32> to vector<1x256xf32>
    %cst_26 = arith.constant dense<0.000000e+00> : vector<4x256xf32>
    %93 = tpu.matmul %11, %6, %cst_26 {dimension_numbers = #tpu.dot_dimension_numbers<[1], [0], [0], [1], [0, 0, 1, 1], [], []>} : vector<4x32xbf16>, vector<32x256xbf16>, vector<4x256xf32> -> vector<4x256xf32>
    %94 = tpu.iota {dimensions = array<i32: 0>} : vector<4x256xi32>
    %95 = vector.broadcast %88 : vector<1x256xi32> to vector<4x256xi32>
    %96 = arith.cmpi eq, %94, %95 : vector<4x256xi32>
    %cst_27 = arith.constant 0.000000e+00 : f32
    %97 = vector.broadcast %cst_27 : f32 to vector<4x256xf32>
    %98 = arith.select %96, %93, %97 : vector<4x256xi1>, vector<4x256xf32>
    %cst_28 = arith.constant dense<0.000000e+00> : vector<256xf32>
    %99 = vector.multi_reduction <add>, %98, %cst_28 [0] : vector<4x256xf32> to vector<256xf32>
    %100 = vector.shape_cast %99 : vector<256xf32> to vector<1x256xf32>
    %cst_29 = arith.constant 0.000000e+00 : f32
    %101 = vector.broadcast %cst_29 : f32 to vector<1x256xf32>
    %102 = arith.cmpf ogt, %8, %101 : vector<1x256xf32>
    %cst_30 = arith.constant 1.000000e+00 : f32
    %103 = vector.broadcast %cst_30 : f32 to vector<1x256xf32>
    %104 = arith.select %102, %8, %103 : vector<1x256xi1>, vector<1x256xf32>
    %105 = math.rsqrt %104 : vector<1x256xf32>
    %106 = arith.mulf %100, %105 : vector<1x256xf32>
    %cst_31 = arith.constant 0.000000e+00 : f32
    %107 = vector.broadcast %cst_31 : f32 to vector<1x256xf32>
    %108 = arith.subf %107, %106 : vector<1x256xf32>
    %cst_32 = arith.constant 1.000000e+00 : f32
    %109 = vector.broadcast %cst_32 : f32 to vector<1x256xf32>
    %110 = arith.addf %108, %109 : vector<1x256xf32>
    %cst_33 = arith.constant 5.000000e-01 : f32
    %111 = vector.broadcast %cst_33 : f32 to vector<1x256xf32>
    %112 = arith.mulf %110, %111 : vector<1x256xf32>
    %c0_34 = arith.constant 0 : index
    %c0_35 = arith.constant 0 : index
    %c0_36 = arith.constant 0 : index
    %113 = vector.load %arg8[%c0_34, %c0_35, %c0_36] : memref<1x8x256xf32, #tpu.memory_space<vmem>>, vector<1x1x256xf32>
    %114 = vector.shape_cast %113 : vector<1x1x256xf32> to vector<1x256xf32>
    %115 = arith.mulf %112, %92 : vector<1x256xf32>
    %116 = arith.addf %114, %115 : vector<1x256xf32>
    %c0_37 = arith.constant 0 : index
    %c0_38 = arith.constant 0 : index
    %c0_39 = arith.constant 0 : index
    %117 = vector.load %arg8[%c0_37, %c0_38, %c0_39] : memref<1x8x256xf32, #tpu.memory_space<vmem>>, vector<1x1x256xf32>
    %118 = vector.shape_cast %117 : vector<1x1x256xf32> to vector<1x256xf32>
    %119 = vector.shape_cast %116 : vector<1x256xf32> to vector<1x1x256xf32>
    tpu.vector_store %arg8[%c0_37, %c0_38, %c0_39], %119 {strides = array<i32>} : memref<1x8x256xf32, #tpu.memory_space<vmem>>, vector<1x1x256xf32>,
    %c0_40 = arith.constant 0 : index
    %c0_41 = arith.constant 0 : index
    %c0_42 = arith.constant 0 : index
    %120 = vector.load %arg9[%c0_40, %c0_41, %c0_42] : memref<1x8x256xf32, #tpu.memory_space<vmem>>, vector<1x1x256xf32>
    %121 = vector.shape_cast %120 : vector<1x1x256xf32> to vector<1x256xf32>
    %122 = arith.addf %121, %92 : vector<1x256xf32>
    %c0_43 = arith.constant 0 : index
    %c0_44 = arith.constant 0 : index
    %c0_45 = arith.constant 0 : index
    %123 = vector.load %arg9[%c0_43, %c0_44, %c0_45] : memref<1x8x256xf32, #tpu.memory_space<vmem>>, vector<1x1x256xf32>
    %124 = vector.shape_cast %123 : vector<1x1x256xf32> to vector<1x256xf32>
    %125 = vector.shape_cast %122 : vector<1x256xf32> to vector<1x1x256xf32>
    tpu.vector_store %arg9[%c0_43, %c0_44, %c0_45], %125 {strides = array<i32>} : memref<1x8x256xf32, #tpu.memory_space<vmem>>, vector<1x1x256xf32>,
    return
  }
  func.func @transform_0(%arg0: i32, %arg1: i32, %arg2: i32) -> (i32, i32, i32) {
    %c2_i32 = arith.constant 2 : i32
    %0 = arith.muli %arg1, %c2_i32 : i32
    %1 = arith.addi %0, %arg2 : i32
    %c0_i32 = arith.constant 0 : i32
    %c0_i32_0 = arith.constant 0 : i32
    return %arg0, %c0_i32, %1 : i32, i32, i32
  }
  func.func @transform_1(%arg0: i32, %arg1: i32, %arg2: i32) -> (i32, i32, i32) {
    %c2_i32 = arith.constant 2 : i32
    %0 = arith.muli %arg1, %c2_i32 : i32
    %1 = arith.addi %0, %arg2 : i32
    %c0_i32 = arith.constant 0 : i32
    %c0_i32_0 = arith.constant 0 : i32
    return %arg0, %c0_i32, %1 : i32, i32, i32
  }
  func.func @transform_2(%arg0: i32, %arg1: i32, %arg2: i32) -> (i32, i32, i32) {
    %c2_i32 = arith.constant 2 : i32
    %0 = arith.muli %arg1, %c2_i32 : i32
    %1 = arith.addi %0, %arg2 : i32
    %c0_i32 = arith.constant 0 : i32
    %c0_i32_0 = arith.constant 0 : i32
    return %arg0, %c0_i32, %1 : i32, i32, i32
  }
  func.func @transform_3(%arg0: i32, %arg1: i32, %arg2: i32) -> (i32, i32, i32) {
    %c0_i32 = arith.constant 0 : i32
    %c0_i32_0 = arith.constant 0 : i32
    %c0_i32_1 = arith.constant 0 : i32
    return %arg0, %c0_i32, %c0_i32_0 : i32, i32, i32
  }
  func.func @transform_4(%arg0: i32, %arg1: i32, %arg2: i32) -> (i32, i32) {
    %c0_i32 = arith.constant 0 : i32
    %c0_i32_0 = arith.constant 0 : i32
    %c0_i32_1 = arith.constant 0 : i32
    return %c0_i32, %c0_i32_0 : i32, i32
  }
  func.func @transform_5(%arg0: i32, %arg1: i32, %arg2: i32) -> (i32, i32, i32) {
    %c0_i32 = arith.constant 0 : i32
    %c0_i32_0 = arith.constant 0 : i32
    return %arg0, %arg1, %c0_i32 : i32, i32, i32
  }
  func.func @transform_6(%arg0: i32, %arg1: i32, %arg2: i32) -> (i32, i32, i32) {
    %c0_i32 = arith.constant 0 : i32
    %c0_i32_0 = arith.constant 0 : i32
    return %arg0, %arg1, %c0_i32 : i32, i32, i32
  }
}

</mosaic_0001>

<llo_original>
// kernel: _ccs_loss_call.1
$region0: #{_ccs_loss_call.1}
  #allocation0 [shape = 'u32[]', space=smem, size = 0x4, offset = 0x4, fixed_abs, tag = 'smem constant byte address 0x4 - core index']
  #allocation1 [shape = 'u32[144,128]{1,0:T(1,128)}', space=vmem, size = 0x12000, scoped, tag = 'internal scratch']
  %s0 = inlined_call_operand.hbm [shape: f32[2,4,1024], index: 0, kind: input, shape index: {}]
  %s1 = inlined_call_operand.hbm [shape: bf16[2,32,1024], index: 1, kind: input, shape index: {}]
  %s2 = inlined_call_operand.vmem [shape: f32[2,1,1024], index: 2, kind: input, shape index: {}]
  %s3 = inlined_call_operand.vmem [shape: f32[2,8,5], index: 3, kind: input, shape index: {}]
  %s4 = inlined_call_operand.vmem [shape: bf16[4,32], index: 4, kind: input, shape index: {}]
  %s5 = inlined_call_operand.vmem [shape: f32[2,16,256], index: 5, kind: output, shape index: {0}]
  %s6 = inlined_call_operand.vmem [shape: f32[2,16,256], index: 6, kind: output, shape index: {1}]
  %7 = xla_tuple %s5, %s6
  %s8 = sld [smem:[#allocation0]]
  $region73: #{_ccs_loss_call.1} parent=0
    _
  %s10 = ssub.s32 1, %s8
  %s11 = scalar_select 0, %s10, %s8
  $region1: #{_ccs_loss_call.1} parent=0
    #allocation2 [shape = 'u8[8192]{0}', space=vmem, size = 0x2000, scoped, tag = 'input window, operand 0']
    #allocation3 [shape = 's32[2]{0}', space=sflag, size = 0x8, scoped, tag = 'scoped memory for _ccs_loss_call.1']
    #allocation4 [shape = 'u8[32768]{0}', space=vmem, size = 0x8000, scoped, tag = 'input window, operand 1']
    #allocation5 [shape = 's32[2]{0}', space=sflag, size = 0x8, scoped, tag = 'scoped memory for _ccs_loss_call.1']
    %12 = vsyncpa [#allocation3], 0
    %s13 = scalar_lea.sflag [#allocation3], 1
    %14 = vsyncpa %s13, 0
    %15 = vsyncpa [#allocation5], 0
    %s16 = scalar_lea.sflag [#allocation5], 1
    %17 = vsyncpa %s16, 0
    loop: start=0, step=1, limit=10
    $region2: #{_ccs_loss_call.1} parent=1 // loop_pre_header
      _
    $region3: #{_ccs_loss_call.1} parent=1 // loop_header
      %s19 = sphi 0, %s23
      %p20 = scmp.ge.s32.totalorder %s19, 10
      %s26 = sphi 0, %s45
      %s27 = sphi 0, %s41
      %s28 = sphi 0, %s37
      %s29 = sphi 0, %s26
      %s30 = sphi 0, %s27
      %s31 = sphi 0, %s28
      %s32 = sphi 0, %s29
      %s33 = sphi 0, %s30
      %s34 = sphi 0, %s31
      %s54 = sphi 0, %s56
      %s57 = sphi 0, %s54
      %s58 = sphi 0, %s57
      %s74 = sphi 0, %s58
      %s86 = sphi 0, %s88
      %s89 = sphi 0, %s86
      %s90 = sphi 0, %s89
      %s106 = sphi 0, %s90
      %s118 = sphi 0, %s120
      %s121 = sphi 0, %s118
      %s122 = sphi 0, %s121
      %s138 = sphi 0, %s122
      %s144 = sphi 0, %s146
      %s147 = sphi 0, %s144
      %s148 = sphi 0, %s147
      %s164 = sphi 0, %s148
      %s168 = sphi 0, %s168
      %s170 = sphi 0, %s168
      %s171 = sphi 0, %s170
      %s185 = sphi 0, %s171
      %s193 = sphi 0, %s195
      %s196 = sphi 0, %s193
      %s197 = sphi 0, %s196
      %s213 = sphi 0, %s197
      %s221 = sphi 0, %s223
      %s224 = sphi 0, %s221
      %s225 = sphi 0, %s224
      %s241 = sphi 0, %s225
    $region4: #{_ccs_loss_call.1} parent=1 // loop_header_branch
      %22 = sbr.rel (%p20) target = $region8
    $region5: #{_ccs_loss_call.1} parent=1 // loop_body
      %s24 = ssub.s32 %s19, 1
      %s25 = ssub.s32 %s19, 2
      %s35 = sadd.s32 1, %s28
      %p36 = scmp.ge.s32.totalorder %s35, 2
      %s37 = scalar_select %p36, 0, %s35
      %s38 = sadd.s32 1, %s27
      %s39 = scalar_select %p36, %s38, %s27
      %p40 = scmp.ge.s32.totalorder %s39, 2
      %s41 = scalar_select %p40, 0, %s39
      %s42 = sadd.s32 1, %s26
      %s43 = scalar_select %p40, %s42, %s26
      %p44 = scmp.ge.s32.totalorder %s43, 2
      %s45 = scalar_select %p44, 0, %s43
      %s46 = smul.u32 %s27, 2
      %s47 = sadd.s32 %s46, %s28
      %s48 = smul.u32 %s41, 2
      %s49 = sadd.s32 %s48, %s37
      %s50 = ssub.s32 %s26, %s45
      %s51 = ssub.s32 %s47, %s49
      %s52 = sor.u32 %s50, %s51
      %p53 = scmp.eq.s32.totalorder %s52, 0
      %s55 = sadd.s32 %s54, 1
      %s56 = scalar_select %p53, %s54, %s55
      %p59 = pneg %p53
      %p60 = scmp.eq.s32.totalorder %s19, 7
      %p61 = por %p59, %p60
      %p62 = scmp.ne.s32.totalorder %s54, %s57
      %p63 = scmp.eq.s32.totalorder %s19, 0
      %p64 = por %p62, %p63
      %p65 = scmp.ne.s32.totalorder %s54, %s57
      %p66 = scmp.eq.s32.totalorder %s24, 7
      %p67 = por %p65, %p66
      %p68 = scmp.ne.s32.totalorder %s57, %s58
      %p69 = scmp.eq.s32.totalorder %s24, 0
      %p70 = por %p68, %p69
      %p71 = scmp.ne.s32.totalorder %s57, %s58
      %p72 = scmp.eq.s32.totalorder %s25, 7
      %p73 = por %p71, %p72
      %p75 = scmp.ne.s32.totalorder %s58, %s74
      %p76 = scmp.eq.s32.totalorder %s25, 0
      %p77 = por %p75, %p76
      %s78 = smul.u32 %s27, 2
      %s79 = sadd.s32 %s78, %s28
      %s80 = smul.u32 %s41, 2
      %s81 = sadd.s32 %s80, %s37
      %s82 = ssub.s32 %s26, %s45
      %s83 = ssub.s32 %s79, %s81
      %s84 = sor.u32 %s82, %s83
      %p85 = scmp.eq.s32.totalorder %s84, 0
      %s87 = sadd.s32 %s86, 1
      %s88 = scalar_select %p85, %s86, %s87
      %p91 = pneg %p85
      %p92 = scmp.eq.s32.totalorder %s19, 7
      %p93 = por %p91, %p92
      %p94 = scmp.ne.s32.totalorder %s86, %s89
      %p95 = scmp.eq.s32.totalorder %s19, 0
      %p96 = por %p94, %p95
      %p97 = scmp.ne.s32.totalorder %s86, %s89
      %p98 = scmp.eq.s32.totalorder %s24, 7
      %p99 = por %p97, %p98
      %p100 = scmp.ne.s32.totalorder %s89, %s90
      %p101 = scmp.eq.s32.totalorder %s24, 0
      %p102 = por %p100, %p101
      %p103 = scmp.ne.s32.totalorder %s89, %s90
      %p104 = scmp.eq.s32.totalorder %s25, 7
      %p105 = por %p103, %p104
      %p107 = scmp.ne.s32.totalorder %s90, %s106
      %p108 = scmp.eq.s32.totalorder %s25, 0
      %p109 = por %p107, %p108
      %s110 = smul.u32 %s27, 2
      %s111 = sadd.s32 %s110, %s28
      %s112 = smul.u32 %s41, 2
      %s113 = sadd.s32 %s112, %s37
      %s114 = ssub.s32 %s26, %s45
      %s115 = ssub.s32 %s111, %s113
      %s116 = sor.u32 %s114, %s115
      %p117 = scmp.eq.s32.totalorder %s116, 0
      %s119 = sadd.s32 %s118, 1
      %s120 = scalar_select %p117, %s118, %s119
      %p123 = pneg %p117
      %p124 = scmp.eq.s32.totalorder %s19, 7
      %p125 = por %p123, %p124
      %p126 = scmp.ne.s32.totalorder %s118, %s121
      %p127 = scmp.eq.s32.totalorder %s19, 0
      %p128 = por %p126, %p127
      %p129 = scmp.ne.s32.totalorder %s118, %s121
      %p130 = scmp.eq.s32.totalorder %s24, 7
      %p131 = por %p129, %p130
      %p132 = scmp.ne.s32.totalorder %s121, %s122
      %p133 = scmp.eq.s32.totalorder %s24, 0
      %p134 = por %p132, %p133
      %p135 = scmp.ne.s32.totalorder %s121, %s122
      %p136 = scmp.eq.s32.totalorder %s25, 7
      %p137 = por %p135, %p136
      %p139 = scmp.ne.s32.totalorder %s122, %s138
      %p140 = scmp.eq.s32.totalorder %s25, 0
      %p141 = por %p139, %p140
      %s142 = ssub.s32 %s26, %s45
      %p143 = scmp.eq.s32.totalorder %s142, 0
      %s145 = sadd.s32 %s144, 1
      %s146 = scalar_select %p143, %s144, %s145
      %p149 = pneg %p143
      %p150 = scmp.eq.s32.totalorder %s19, 7
      %p151 = por %p149, %p150
      %p152 = scmp.ne.s32.totalorder %s144, %s147
      %p153 = scmp.eq.s32.totalorder %s19, 0
      %p154 = por %p152, %p153
      %p155 = scmp.ne.s32.totalorder %s144, %s147
      %p156 = scmp.eq.s32.totalorder %s24, 7
      %p157 = por %p155, %p156
      %p158 = scmp.ne.s32.totalorder %s147, %s148
      %p159 = scmp.eq.s32.totalorder %s24, 0
      %p160 = por %p158, %p159
      %p161 = scmp.ne.s32.totalorder %s147, %s148
      %p162 = scmp.eq.s32.totalorder %s25, 7
      %p163 = por %p161, %p162
      %p165 = scmp.ne.s32.totalorder %s148, %s164
      %p166 = scmp.eq.s32.totalorder %s25, 0
      %p167 = por %p165, %p166
      %s169 = sadd.s32 %s168, 1
      %p172 = scmp.eq.s32.totalorder %s19, 7
      %p173 = scmp.ne.s32.totalorder %s168, %s170
      %p174 = scmp.eq.s32.totalorder %s19, 0
      %p175 = por %p173, %p174
      %p176 = scmp.ne.s32.totalorder %s168, %s170
      %p177 = scmp.eq.s32.totalorder %s24, 7
      %p178 = por %p176, %p177
      %p179 = scmp.ne.s32.totalorder %s170, %s171
      %p180 = scmp.eq.s32.totalorder %s24, 0
      %p181 = por %p179, %p180
      %p182 = scmp.ne.s32.totalorder %s170, %s171
      %p183 = scmp.eq.s32.totalorder %s25, 7
      %p184 = por %p182, %p183
      %p186 = scmp.ne.s32.totalorder %s171, %s185
      %p187 = scmp.eq.s32.totalorder %s25, 0
      %p188 = por %p186, %p187
      %s189 = ssub.s32 %s26, %s45
      %s190 = ssub.s32 %s27, %s41
      %s191 = sor.u32 %s189, %s190
      %p192 = scmp.eq.s32.totalorder %s191, 0
      %s194 = sadd.s32 %s193, 1
      %s195 = scalar_select %p192, %s193, %s194
      %p198 = pneg %p192
      %p199 = scmp.eq.s32.totalorder %s19, 7
      %p200 = por %p198, %p199
      %p201 = scmp.ne.s32.totalorder %s193, %s196
      %p202 = scmp.eq.s32.totalorder %s19, 0
      %p203 = por %p201, %p202
      %p204 = scmp.ne.s32.totalorder %s193, %s196
      %p205 = scmp.eq.s32.totalorder %s24, 7
      %p206 = por %p204, %p205
      %p207 = scmp.ne.s32.totalorder %s196, %s197
      %p208 = scmp.eq.s32.totalorder %s24, 0
      %p209 = por %p207, %p208
      %p210 = scmp.ne.s32.totalorder %s196, %s197
      %p211 = scmp.eq.s32.totalorder %s25, 7
      %p212 = por %p210, %p211
      %p214 = scmp.ne.s32.totalorder %s197, %s213
      %p215 = scmp.eq.s32.totalorder %s25, 0
      %p216 = por %p214, %p215
      %s217 = ssub.s32 %s26, %s45
      %s218 = ssub.s32 %s27, %s41
      %s219 = sor.u32 %s217, %s218
      %p220 = scmp.eq.s32.totalorder %s219, 0
      %s222 = sadd.s32 %s221, 1
      %s223 = scalar_select %p220, %s221, %s222
      %p226 = pneg %p220
      %p227 = scmp.eq.s32.totalorder %s19, 7
      %p228 = por %p226, %p227
      %p229 = scmp.ne.s32.totalorder %s221, %s224
      %p230 = scmp.eq.s32.totalorder %s19, 0
      %p231 = por %p229, %p230
      %p232 = scmp.ne.s32.totalorder %s221, %s224
      %p233 = scmp.eq.s32.totalorder %s24, 7
      %p234 = por %p232, %p233
      %p235 = scmp.ne.s32.totalorder %s224, %s225
      %p236 = scmp.eq.s32.totalorder %s24, 0
      %p237 = por %p235, %p236
      %p238 = scmp.ne.s32.totalorder %s224, %s225
      %p239 = scmp.eq.s32.totalorder %s25, 7
      %p240 = por %p238, %p239
      %p242 = scmp.ne.s32.totalorder %s225, %s241
      %p243 = scmp.eq.s32.totalorder %s25, 0
      %p244 = por %p242, %p243
      %p245 = scmp.le.s32.totalorder 1, %s19
      %p246 = scmp.lt.s32.totalorder %s19, 9
      %p247 = pnand %p245, %p246
      %p248 = pneg %p247
      // Predicated region
      $region9: #{_ccs_loss_call.1} parent=5 // pred_check
        _
      $region10: #{_ccs_loss_call.1} parent=5 // pred_check_branch
        %250 = sbr.rel (%p247) target = $region12
      $region11: #{_ccs_loss_call.1} parent=5 // pred_region
        %s251 = ssub.s32 %s19, 1
        // Predicated region
        $region13: #{_ccs_loss_call.1} parent=11 // pred_check
          %p252 = pneg %p181
        $region14: #{_ccs_loss_call.1} parent=11 // pred_check_branch
          %254 = sbr.rel (%p252) target = $region16
        $region15: #{_ccs_loss_call.1} parent=11 // pred_region
          _
        $region16: #{_ccs_loss_call.1} parent=11 // pred_fallthru
          _
      $region12: #{_ccs_loss_call.1} parent=5 // pred_fallthru
        _
      %p255 = scmp.lt.s32.totalorder %s19, 8
      // Predicated region
      $region17: #{_ccs_loss_call.1} parent=5 // pred_check
        %p256 = pneg %p255
      $region18: #{_ccs_loss_call.1} parent=5 // pred_check_branch
        %258 = sbr.rel (%p256) target = $region20
      $region19: #{_ccs_loss_call.1} parent=5 // pred_region
        // Predicated region
        $region21: #{_ccs_loss_call.1} parent=19 // pred_check
          %p259 = pneg %p64
        $region22: #{_ccs_loss_call.1} parent=19 // pred_check_branch
          %261 = sbr.rel (%p259) target = $region24
        $region23: #{_ccs_loss_call.1} parent=19 // pred_region
          %s262 = sand.u32 %s54, 1
          %s263 = scalar_lea.sflag [#allocation3], %s262
          %s264 = sand.u32 %s54, 1
          %s265 = smul.addr %s264, 8
          %s266 = scalar_lea.vmem [#allocation2], %s265
          %s267 = smul.u32 %s27, 2
          %s268 = sadd.s32 %s267, %s28
          %s269 = smul.u32 2, %s268
          %s271 = ssub.s32 128, 128
          %272 = vsyncadd %s263, %s271
          %s273 = smul.addr %s26, 8
          %s274 = sadd.s32 %s269, %s273
          %s275 = smul.addr %s274, 64
          %s276 = scalar_lea.hbm %s0, %s275
          %s278 = sshll.u32 %s266, 4
          %s279 = int_to_ptr.vmem [resolvable:$true] %s278
          %281 = dma.hbm_to_vmem [thread:$0]  %s276, 128, %s279, %s263
        $region24: #{_ccs_loss_call.1} parent=19 // pred_fallthru
          _
        // Predicated region
        $region25: #{_ccs_loss_call.1} parent=19 // pred_check
          %p282 = pneg %p96
        $region26: #{_ccs_loss_call.1} parent=19 // pred_check_branch
          %284 = sbr.rel (%p282) target = $region28
        $region27: #{_ccs_loss_call.1} parent=19 // pred_region
          %s285 = sand.u32 %s86, 1
          %s286 = scalar_lea.sflag [#allocation5], %s285
          %s287 = sand.u32 %s86, 1
          %s288 = smul.addr %s287, 32
          %s289 = scalar_lea.vmem [#allocation4], %s288
          %s290 = smul.u32 %s27, 2
          %s291 = sadd.s32 %s290, %s28
          %s292 = smul.u32 2, %s291
          %s294 = ssub.s32 512, 512
          %295 = vsyncadd %s286, %s294
          %s296 = smul.addr %s26, 32
          %s297 = sadd.s32 %s292, %s296
          %s298 = smul.addr %s297, 64
          %s299 = scalar_lea.hbm %s1, %s298
          %s300 = sshll.u32 %s289, 4
          %s301 = int_to_ptr.vmem [resolvable:$true] %s300
          %306 = dma.hbm_to_vmem [thread:$0]  %s299, 512, %s301, %s286, 512, 128, 8
        $region28: #{_ccs_loss_call.1} parent=19 // pred_fallthru
          _
        // Predicated region
        $region29: #{_ccs_loss_call.1} parent=19 // pred_check
          %p307 = pneg %p128
        $region30: #{_ccs_loss_call.1} parent=19 // pred_check_branch
          %309 = sbr.rel (%p307) target = $region32
        $region31: #{_ccs_loss_call.1} parent=19 // pred_region
          %s310 = smul.u32 %s27, 2
          %s311 = sadd.s32 %s310, %s28
          %s312 = smul.u32 2, %s311
          %p313 = scmp.lt.s32.totalorder %s26, 1
          %s314 = scalar_select %p313, %s26, 1
          %p315 = scmp.lt.s32.totalorder %s312, 7
          %s316 = scalar_select %p315, %s312, 7
          %s317 = smul.addr %s314, 8
          %s318 = sadd.s32 %s316, %s317
          %s319 = scalar_lea.vmem %s2, %s318
          %s320 = smul.u32 %s27, 2
          %s321 = sadd.s32 %s320, %s28
          %s322 = smul.u32 2, %s321
        $region32: #{_ccs_loss_call.1} parent=19 // pred_fallthru
          _
        // Predicated region
        $region33: #{_ccs_loss_call.1} parent=19 // pred_check
          %p323 = pneg %p154
        $region34: #{_ccs_loss_call.1} parent=19 // pred_check_branch
          %325 = sbr.rel (%p323) target = $region36
        $region35: #{_ccs_loss_call.1} parent=19 // pred_region
          %p326 = scmp.lt.s32.totalorder %s26, 1
          %s327 = scalar_select %p326, %s26, 1
          %s328 = smul.addr %s327, 8
          %s329 = scalar_lea.vmem %s3, %s328
        $region36: #{_ccs_loss_call.1} parent=19 // pred_fallthru
          _
      $region20: #{_ccs_loss_call.1} parent=5 // pred_fallthru
        _
      %p330 = scmp.le.s32.totalorder 1, %s19
      %p331 = scmp.lt.s32.totalorder %s19, 9
      %p332 = pnand %p330, %p331
      %p333 = pneg %p332
      // Predicated region
      $region37: #{_ccs_loss_call.1} parent=5 // pred_check
        _
      $region38: #{_ccs_loss_call.1} parent=5 // pred_check_branch
        %335 = sbr.rel (%p332) target = $region40
      $region39: #{_ccs_loss_call.1} parent=5 // pred_region
        %s336 = ssub.s32 %s19, 1
        %s337 = sand.u32 %s57, 1
        %s338 = scalar_lea.sflag [#allocation3], %s337
        %s339 = sand.u32 %s57, 1
        %s340 = smul.addr %s339, 8
        %s341 = scalar_lea.vmem [#allocation2], %s340
        // Predicated region
        $region41: #{_ccs_loss_call.1} parent=39 // pred_check
          %p342 = pneg %p70
        $region42: #{_ccs_loss_call.1} parent=39 // pred_check_branch
          %344 = sbr.rel (%p342) target = $region44
        $region43: #{_ccs_loss_call.1} parent=39 // pred_region
          %345 = dma.done %s338, 128
        $region44: #{_ccs_loss_call.1} parent=39 // pred_fallthru
          _
        %s346 = sand.u32 %s89, 1
        %s347 = scalar_lea.sflag [#allocation5], %s346
        %s348 = sand.u32 %s89, 1
        %s349 = smul.addr %s348, 32
        %s350 = scalar_lea.vmem [#allocation4], %s349
        // Predicated region
        $region45: #{_ccs_loss_call.1} parent=39 // pred_check
          %p351 = pneg %p102
        $region46: #{_ccs_loss_call.1} parent=39 // pred_check_branch
          %353 = sbr.rel (%p351) target = $region48
        $region47: #{_ccs_loss_call.1} parent=39 // pred_region
          %354 = dma.done %s347, 512
        $region48: #{_ccs_loss_call.1} parent=39 // pred_fallthru
          _
        %s355 = sand.u32 %s57, 1
        %s356 = scalar_lea.sflag [#allocation3], %s355
        %s357 = sand.u32 %s57, 1
        %s358 = smul.addr %s357, 8
        %s359 = scalar_lea.vmem [#allocation2], %s358
        %p360 = pneg %p70
        %p361 = pneg %p67
        %s362 = sand.u32 %s89, 1
        %s363 = scalar_lea.sflag [#allocation5], %s362
        %s364 = sand.u32 %s89, 1
        %s365 = smul.addr %s364, 32
        %s366 = scalar_lea.vmem [#allocation4], %s365
        %p367 = pneg %p102
        %p368 = pneg %p99
        %s369 = smul.u32 %s30, 2
        %s370 = sadd.s32 %s369, %s31
        %s371 = smul.u32 2, %s370
        %p372 = scmp.lt.s32.totalorder %s29, 1
        %s373 = scalar_select %p372, %s29, 1
        %p374 = scmp.lt.s32.totalorder %s371, 7
        %s375 = scalar_select %p374, %s371, 7
        %s376 = smul.addr %s373, 8
        %s377 = sadd.s32 %s375, %s376
        %s378 = scalar_lea.vmem %s2, %s377
        %p379 = pneg %p134
        %p380 = pneg %p131
        %p381 = scmp.lt.s32.totalorder %s29, 1
        %s382 = scalar_select %p381, %s29, 1
        %s383 = smul.addr %s382, 8
        %s384 = scalar_lea.vmem %s3, %s383
        %p385 = pneg %p160
        %p386 = pneg %p157
        %p387 = pneg %p181
        %p388 = pneg %p178
        %p389 = pneg %p209
        %p390 = pneg %p206
        %p391 = scmp.lt.s32.totalorder %s29, 1
        %s392 = scalar_select %p391, %s29, 1
        %p393 = scmp.lt.s32.totalorder %s30, 1
        %s394 = scalar_select %p393, %s30, 1
        %s395 = smul.addr %s394, 2
        %s396 = smul.addr %s392, 4
        %s397 = sadd.s32 %s395, %s396
        %s398 = smul.addr %s397, 8
        %s399 = scalar_lea.vmem %s5, %s398
        %p400 = pneg %p237
        %p401 = pneg %p234
        %p402 = scmp.lt.s32.totalorder %s29, 1
        %s403 = scalar_select %p402, %s29, 1
        %p404 = scmp.lt.s32.totalorder %s30, 1
        %s405 = scalar_select %p404, %s30, 1
        %s406 = smul.addr %s405, 2
        %s407 = smul.addr %s403, 4
        %s408 = sadd.s32 %s406, %s407
        %s409 = smul.addr %s408, 8
        %s410 = scalar_lea.vmem %s6, %s409
        %s411 = smul.u32 %s30, 2
        %s412 = sadd.s32 %s411, %s31
        %s413 = smul.u32 2, %s412
        %s414 = smul.u32 %s30, 2
        %s415 = sadd.s32 %s414, %s31
        %s416 = smul.u32 2, %s415
        %s417 = smul.u32 %s30, 2
        %s418 = sadd.s32 %s417, %s31
        %s419 = smul.u32 2, %s418
        %p420 = scmp.lt.s32.totalorder %s29, 1
        %s421 = scalar_select %p420, %s29, 1
        %p422 = scmp.lt.s32.totalorder %s419, 7
        %s423 = scalar_select %p422, %s419, 7
        %s424 = smul.addr %s421, 8
        %s425 = sadd.s32 %s423, %s424
        %s426 = scalar_lea.vmem %s2, %s425
        %s427 = smul.u32 %s30, 2
        %s428 = sadd.s32 %s427, %s31
        %s429 = smul.u32 2, %s428
        %p430 = scmp.lt.s32.totalorder %s29, 1
        %s431 = scalar_select %p430, %s29, 1
        %s432 = smul.addr %s431, 8
        %s433 = scalar_lea.vmem %s3, %s432
        %p434 = scmp.lt.s32.totalorder %s29, 1
        %s435 = scalar_select %p434, %s29, 1
        %p436 = scmp.lt.s32.totalorder %s30, 1
        %s437 = scalar_select %p436, %s30, 1
        %s438 = smul.addr %s437, 2
        %s439 = smul.addr %s435, 4
        %s440 = sadd.s32 %s438, %s439
        %s441 = smul.addr %s440, 8
        %s442 = scalar_lea.vmem %s5, %s441
        %p443 = scmp.lt.s32.totalorder %s29, 1
        %s444 = scalar_select %p443, %s29, 1
        %p445 = scmp.lt.s32.totalorder %s30, 1
        %s446 = scalar_select %p445, %s30, 1
        %s447 = smul.addr %s446, 2
        %s448 = smul.addr %s444, 4
        %s449 = sadd.s32 %s447, %s448
        %s450 = smul.addr %s449, 8
        %s451 = scalar_lea.vmem %s6, %s450
        %p453 = scmp.eq.s32.totalorder %s31, 0
        // Predicated region
        $region49: #{_ccs_loss_call.1} parent=39 // pred_check
          %p454 = pneg %p453
        $region50: #{_ccs_loss_call.1} parent=39 // pred_check_branch
          %456 = sbr.rel (%p454) target = $region52
        $region51: #{_ccs_loss_call.1} parent=39 // pred_region
          %457 = vst [vmem:[%s442] sm:$0xff] 0.0
          %458 = vst [vmem:[%s442 + $0x8] sm:$0xff] 0.0
          %459 = vst [vmem:[%s451] sm:$0xff] 0.0
          %460 = vst [vmem:[%s451 + $0x8] sm:$0xff] 0.0
        $region52: #{_ccs_loss_call.1} parent=39 // pred_fallthru
          _
        %v461 = vld [vmem:[%s341] sm:$0xff]
        %v462 = vld [vmem:[%s350] sm:$0xff]
        %v463 = vld [vmem:[%s350 + $0x8] sm:$0xff]
        %v464 = vld [vmem:[%s350 + $0x10] sm:$0xff]
        %v465 = vld [vmem:[%s350 + $0x18] sm:$0xff]
        %v466 = vld [vmem:[%s426] sm:$0x3]
        %v467 = vld [vmem:[%s433] sm:$0xff]
        %v468 = vld [vmem:[%s4] sm:$0x3]
        %vm469 = vcmp.ne.f32.partialorder %v467, -1.0
        %v471 = vlaneseq
        %v472 = vshrl.u32 %v471, 7
        %v473 = vsub.s32 2, %v472
        %v474 = vrot.slane %v461, %v473
        %v475 = vlaneseq
        %v476 = vshrl.u32 %v475, 7
        %v477 = vsub.s32 6, %v476
        %v478 = vrot.slane %v461, %v477
        %v481 = vlaneseq
        %v482 = vshrl.u32 %v481, 7
        %v483 = vsub.s32 2, %v482
        %v484 = vrot.slane %v474, %v483
        %v485 = vlaneseq
        %v486 = vshrl.u32 %v485, 7
        %v487 = vsub.s32 2, %v486
        %v488 = vrot.slane %v478, %v487
        %490 = vset.pattern.permute.xlu0 2
        %491 = vperm.xlu0 %490, %v467
        %v492 = vpop.permute.xlu0 %491
        %v494 = vmin.f32 %v484, %v492
        %v495 = vmin.f32 %v488, %v492
        %v496 = vlaneseq
        %v497 = vshrl.u32 %v496, 7
        %v498 = vsub.s32 0, %v497
        %v499 = vrot.slane %v461, %v498
        %v500 = vlaneseq
        %v501 = vshrl.u32 %v500, 7
        %v502 = vsub.s32 4, %v501
        %v503 = vrot.slane %v461, %v502
        %v506 = vlaneseq
        %v507 = vshrl.u32 %v506, 7
        %v508 = vsub.s32 0, %v507
        %v509 = vrot.slane %v499, %v508
        %v510 = vlaneseq
        %v511 = vshrl.u32 %v510, 7
        %v512 = vsub.s32 0, %v511
        %v513 = vrot.slane %v503, %v512
        %514 = vset.pattern.permute.xlu0 0
        %515 = vperm.xlu0 %514, %v467
        %v516 = vpop.permute.xlu0 %515
        %v518 = vmax.f32 %v509, %v516
        %v519 = vmax.f32 %v513, %v516
        %v520 = vsub.f32 %v494, %v518
        %v521 = vsub.f32 %v495, %v519
        %v522 = vmax.f32 %v520, 0.0
        %v523 = vmax.f32 %v521, 0.0
        %v524 = vlaneseq
        %v525 = vshrl.u32 %v524, 7
        %v526 = vsub.s32 3, %v525
        %v527 = vrot.slane %v461, %v526
        %v528 = vlaneseq
        %v529 = vshrl.u32 %v528, 7
        %v530 = vsub.s32 7, %v529
        %v531 = vrot.slane %v461, %v530
        %v534 = vlaneseq
        %v535 = vshrl.u32 %v534, 7
        %v536 = vsub.s32 3, %v535
        %v537 = vrot.slane %v527, %v536
        %v538 = vlaneseq
        %v539 = vshrl.u32 %v538, 7
        %v540 = vsub.s32 3, %v539
        %v541 = vrot.slane %v531, %v540
        %542 = vset.pattern.permute.xlu0 3
        %543 = vperm.xlu0 %542, %v467
        %v544 = vpop.permute.xlu0 %543
        %v546 = vmin.f32 %v537, %v544
        %v547 = vmin.f32 %v541, %v544
        %v548 = vlaneseq
        %v549 = vshrl.u32 %v548, 7
        %v550 = vsub.s32 1, %v549
        %v551 = vrot.slane %v461, %v550
        %v552 = vlaneseq
        %v553 = vshrl.u32 %v552, 7
        %v554 = vsub.s32 5, %v553
        %v555 = vrot.slane %v461, %v554
        %v558 = vlaneseq
        %v559 = vshrl.u32 %v558, 7
        %v560 = vsub.s32 1, %v559
        %v561 = vrot.slane %v551, %v560
        %v562 = vlaneseq
        %v563 = vshrl.u32 %v562, 7
        %v564 = vsub.s32 1, %v563
        %v565 = vrot.slane %v555, %v564
        %566 = vset.pattern.permute.xlu0 1
        %567 = vperm.xlu0 %566, %v467
        %v568 = vpop.permute.xlu0 %567
        %v570 = vmax.f32 %v561, %v568
        %v571 = vmax.f32 %v565, %v568
        %v572 = vsub.f32 %v546, %v570
        %v573 = vsub.f32 %v547, %v571
        %v574 = vmax.f32 %v572, 0.0
        %v575 = vmax.f32 %v573, 0.0
        %v576 = vmul.f32 %v522, %v574
        %v577 = vmul.f32 %v523, %v575
        %v578 = vrot.slane %v461, 6
        %v580 = vsub.f32 %v461, %v578
        %v582 = vrot.slane %v580, 5
        %v583 = vrot.slane %v582, 4
        %v585 = vmul.f32 %v580, %v583
        %586 = vrot.lane.b32.xlu0 %v467, 2
        %v587 = vpop.permute.xlu0 %586
        %v589 = vsub.f32 %v467, %v587
        %591 = vrot.lane.b32.xlu0 %v589, 127
        %v592 = vpop.permute.xlu0 %591
        %v594 = vmul.f32 %v589, %v592
        %v596 = vlaneseq
        %v597 = vshrl.u32 %v596, 7
        %v598 = vsub.s32 2, %v597
        %v599 = vrot.slane %v585, %v598
        %v600 = vlaneseq
        %v601 = vshrl.u32 %v600, 7
        %v602 = vsub.s32 6, %v601
        %v603 = vrot.slane %v585, %v602
        %v606 = vlaneseq
        %v607 = vshrl.u32 %v606, 7
        %v608 = vsub.s32 2, %v607
        %v609 = vrot.slane %v599, %v608
        %v610 = vlaneseq
        %v611 = vshrl.u32 %v610, 7
        %v612 = vsub.s32 2, %v611
        %v613 = vrot.slane %v603, %v612
        %615 = vset.pattern.permute.xlu0 2
        %616 = vperm.xlu0 %615, %v594
        %v617 = vpop.permute.xlu0 %616
        %v619 = vadd.f32 %v609, %v617
        %v620 = vadd.f32 %v613, %v617
        %v621 = vsub.f32 %v619, %v576
        %v622 = vsub.f32 %v620, %v577
        %v623 = vmax.f32 %v621, 1e-08
        %v624 = vmax.f32 %v622, 1e-08
        %v625 = vrcp.pop %v623
        %v626 = vmul.f32 %v576, %v625
        %v627 = vrcp.pop %v624
        %v628 = vmul.f32 %v577, %v627
        %v629 = vsel %vm469, 1, 0
        %630 = vset.pattern.permute.xlu0 4
        %631 = vperm.xlu0 %630, %v629
        %v632 = vpop.permute.xlu0 %631
        %vm633 = vcmp.eq.s32.totalorder %v632, 1
        %v634 = vsel %vm633, %v626, -1.0
        %v635 = vsel %vm633, %v628, -1.0
        %v636 = vrot.slane %v634, 4
        %v637 = vmax.f32 %v634, %v636
        %v638 = vrot.slane %v637, 2
        %v639 = vmax.f32 %v637, %v638
        %v640 = vrot.slane %v639, 1
        %v641 = vmax.f32 %v639, %v640
        %v642 = vrot.slane %v635, 4
        %v643 = vmax.f32 %v635, %v642
        %v644 = vrot.slane %v643, 2
        %v645 = vmax.f32 %v643, %v644
        %v646 = vrot.slane %v645, 1
        %v647 = vmax.f32 %v645, %v646
        %v648 = vlaneseq
        %v649 = vshrl.u32 %v648, 7
        %v650 = vcvt.f32.s32.to.zero.pseudo %v467
        %vm651 = vcmp.eq.f32.partialorder %v634, %v641
        %vm652 = vcmp.eq.f32.partialorder %v635, %v647
        %v653 = vmul.u32 %v649, 4
        %654 = vset.pattern.permute.xlu0 4
        %655 = vperm.xlu0 %654, %v650
        %v656 = vpop.permute.xlu0 %655
        %v657 = vadd.s32 %v653, %v656
        %v658 = vsel %vm651, %v657, 32
        %v659 = vsel %vm652, %v657, 32
        %v660 = vrot.slane %v658, 4
        %vm661 = vcmp.lt.s32.totalorder %v658, %v660
        %v662 = vsel %vm661, %v658, %v660
        %v663 = vrot.slane %v662, 2
        %vm664 = vcmp.lt.s32.totalorder %v662, %v663
        %v665 = vsel %vm664, %v662, %v663
        %v666 = vrot.slane %v665, 1
        %vm667 = vcmp.lt.s32.totalorder %v665, %v666
        %v668 = vsel %vm667, %v665, %v666
        %v669 = vrot.slane %v659, 4
        %vm670 = vcmp.lt.s32.totalorder %v659, %v669
        %v671 = vsel %vm670, %v659, %v669
        %v672 = vrot.slane %v671, 2
        %vm673 = vcmp.lt.s32.totalorder %v671, %v672
        %v674 = vsel %vm673, %v671, %v672
        %v675 = vrot.slane %v674, 1
        %vm676 = vcmp.lt.s32.totalorder %v674, %v675
        %v677 = vsel %vm676, %v674, %v675
        %vm678 = vcmp.lt.s32.totalorder %v668, 0
        %v679 = vsub.s32 0, %v668
        %v680 = vsel %vm678, %v679, %v668
        %v681 = vshrl.u32 %v680, 2
        %v682 = vand.u32 %v680, 3
        %v683 = vsub.s32 0, %v682
        %v684 = vsel %vm678, %v683, %v682
        %vm685 = vcmp.lt.s32.totalorder %v677, 0
        %v686 = vsub.s32 0, %v677
        %v687 = vsel %vm685, %v686, %v677
        %v688 = vshrl.u32 %v687, 2
        %v689 = vand.u32 %v687, 3
        %v690 = vsub.s32 0, %v689
        %v691 = vsel %vm685, %v690, %v689
        %vm692 = vcmp.ne.s32.totalorder %v684, 0
        %vm693 = vcmp.ne.s32.totalorder %v691, 0
        %vm694 = vcmp.lt.s32.totalorder %v684, 0
        %vm695 = vcmp.lt.s32.totalorder %v691, 0
        %vm696 = vmand %vm694, %vm692
        %vm697 = vmand %vm695, %vm693
        %v698 = vadd.s32 %v684, 4
        %v699 = vadd.s32 %v691, 4
        %v700 = vsel %vm696, %v698, %v684
        %v701 = vsel %vm697, %v699, %v691
        %vm702 = vcmp.ge.f32.partialorder %v641, 0.5
        %vm703 = vcmp.ge.f32.partialorder %v647, 0.5
        %v704 = vsel %vm702, 1, 0
        %v705 = vsel %vm703, 1, 0
        %v706 = vcvt.s32.f32 %v704
        %v707 = vcvt.s32.f32 %v705
        %v712 = vunpack.c.l.b16 %v462
        %v713 = vunpack.c.h.b16 %v462
        %v714 = vunpack.c.l.b16 %v463
        %v715 = vunpack.c.h.b16 %v463
        %v716 = vunpack.c.l.b16 %v464
        %v717 = vunpack.c.h.b16 %v464
        %v718 = vunpack.c.l.b16 %v465
        %v719 = vunpack.c.h.b16 %v465
        %v720 = vpack.c.b16 %v714, %v712
        %v721 = vpack.c.b16 %v715, %v713
        %v722 = vpack.c.b16 %v718, %v716
        %v723 = vpack.c.b16 %v719, %v717
        %vm728 = vcmask 261120
        %v730 = vsel %vm728, %v468, 0
        %732 = vmatprep.subr.bf16.mxu0 0
        %733 = vmatpush1.bf16.msra.mxu0 0
        %734 = vmatprep.subr.bf16.mxu0 0
        %735 = vmatpush1.bf16.msra.mxu0 0
        %736 = vmatprep.subr.bf16.mxu0 0
        %737 = vmatpush1.bf16.msra.mxu0 0
        %738 = vmatprep.subr.bf16.mxu0 0
        %739 = vmatpush1.bf16.msra.mxu0 0
        %740 = vmatprep.subr.bf16.mxu0 0
        %741 = vmatpush1.bf16.msra.mxu0 0
        %742 = vmatprep.subr.bf16.mxu0 0
        %743 = vmatpush1.bf16.msra.mxu0 0
        %744 = vmatprep.subr.bf16.mxu0 %v723
        %745 = vmatpush1.bf16.msra.mxu0 %v722
        %746 = vmatprep.subr.bf16.mxu0 %v721
        %747 = vmatpush1.bf16.msra.mxu0 %v720
        %748 = vmatprep.subr.bf16.mxu0 0
        %749 = vmatpush2.bf16.msra.mxu0 0
        %750 = vmatprep.subr.bf16.mxu0 0
        %751 = vmatpush2.bf16.msra.mxu0 0
        %752 = vmatprep.subr.bf16.mxu0 0
        %753 = vmatpush2.bf16.msra.mxu0 0
        %754 = vmatprep.subr.bf16.mxu0 0
        %755 = vmatpush2.bf16.msra.mxu0 0
        %756 = vmatprep.subr.bf16.mxu0 0
        %757 = vmatpush2.bf16.msra.mxu0 0
        %758 = vmatprep.subr.bf16.mxu0 0
        %759 = vmatpush2.bf16.msra.mxu0 0
        %760 = vmatprep.subr.bf16.mxu0 0
        %761 = vmatpush2.bf16.msra.mxu0 0
        %762 = vmatprep.subr.bf16.mxu0 0
        %763 = vmatpush2.bf16.msra.mxu0 0
        %764 = vmatprep.mubr.bf16.mxu0 0
        %765 = vmatmul.mubr.bf16.gmra.mxu0 %v730
        %v766 = vpop.f32.mrf.mxu0
        %v767 = vadd.f32 0.0, %v766
        %v768 = vpop.f32.mrf.mxu0
        %v769 = vadd.f32 0.0, %v768
        %v770 = vpop.f32.mrf.mxu0
        %v771 = vpop.f32.mrf.mxu0
        %772 = vdwg.mxu0
        %vm773 = vcmp.eq.s32.totalorder %v649, %v700
        %vm774 = vcmp.eq.s32.totalorder %v649, %v701
        %v775 = vsel %vm773, %v767, 0.0
        %v776 = vsel %vm774, %v769, 0.0
        %vm777 = vcmask 1043456
        %v778 = vsel %vm777, %v775, 0.0
        %v779 = vrot.slane %v778, 4
        %v780 = vadd.f32 %v778, %v779
        %v781 = vrot.slane %v780, 2
        %v782 = vadd.f32 %v780, %v781
        %v783 = vrot.slane %v782, 1
        %v784 = vadd.f32 %v782, %v783
        %v785 = vsel %vm777, %v776, 0.0
        %v786 = vrot.slane %v785, 4
        %v787 = vadd.f32 %v785, %v786
        %v788 = vrot.slane %v787, 2
        %v789 = vadd.f32 %v787, %v788
        %v790 = vrot.slane %v789, 1
        %v791 = vadd.f32 %v789, %v790
        %vm792 = vcmp.gt.f32.partialorder %v466, 0.0
        %v793 = vsel %vm792, %v466, 1.0
        %v794 = vrsqrt.pop %v793
        %v796 = vlaneseq
        %v797 = vshrl.u32 %v796, 7
        %v798 = vsub.s32 0, %v797
        %v799 = vrot.slane %v794, %v798
        %v800 = vlaneseq
        %v801 = vshrl.u32 %v800, 7
        %v802 = vsub.s32 1, %v801
        %v803 = vrot.slane %v794, %v802
        %v806 = vmul.f32 %v784, %v799
        %v807 = vmul.f32 %v791, %v803
        %v808 = vsub.f32 0.0, %v806
        %v809 = vsub.f32 0.0, %v807
        %v810 = vadd.f32 %v808, 1.0
        %v811 = vadd.f32 %v809, 1.0
        %v812 = vmul.f32 %v810, 0.5
        %v813 = vmul.f32 %v811, 0.5
        %v814 = vld [vmem:[%s442] ss:$8 sm:$0x3]
        %v815 = vmul.f32 %v812, %v706
        %v816 = vmul.f32 %v813, %v707
        %v819 = vcombine.low %v815, %v816
        %v821 = vunpack.c.l.s4 1966171168
        %v822 = vunpack.c.0.s8 %v821
        %v823 = vlaneseq
        %v824 = vshrl.u32 %v823, 7
        %v825 = vsub.s32 %v822, %v824
        %v826 = vrot.slane %v819, %v825
        %v828 = vunpack.c.l.s4 1966171168
        %v829 = vunpack.c.0.s8 %v828
        %v830 = vlaneseq
        %v831 = vshrl.u32 %v830, 7
        %v832 = vsub.s32 %v829, %v831
        %v833 = vrot.slane %v826, %v832
        %v835 = vadd.f32 %v814, %v833
        %v836 = vlaneseq
        %vm837 = vcmp.ge.s32.totalorder %v836, 0
        %vm838 = vcmp.lt.s32.totalorder %v836, 256
        %vm839 = vmand %vm837, %vm838
        %840 = vst.msk [vmem:[%s442] ss:$8 sm:$0x3] %vm839, %v835
        %841 = vst.msk [vmem:[%s442] ss:$8 sm:$0x0] %vm839, %v835
        %v842 = vld [vmem:[%s451] ss:$8 sm:$0x3]
        %v845 = vcombine.low %v706, %v707
        %v847 = vunpack.c.l.s4 1966171168
        %v848 = vunpack.c.0.s8 %v847
        %v849 = vlaneseq
        %v850 = vshrl.u32 %v849, 7
        %v851 = vsub.s32 %v848, %v850
        %v852 = vrot.slane %v845, %v851
        %v854 = vunpack.c.l.s4 1966171168
        %v855 = vunpack.c.0.s8 %v854
        %v856 = vlaneseq
        %v857 = vshrl.u32 %v856, 7
        %v858 = vsub.s32 %v855, %v857
        %v859 = vrot.slane %v852, %v858
        %v861 = vadd.f32 %v842, %v859
        %862 = vst.msk [vmem:[%s451] ss:$8 sm:$0x3] %vm839, %v861
        %863 = vst.msk [vmem:[%s451] ss:$8 sm:$0x0] %vm839, %v861
        %p864 = scmp.lt.s32.totalorder %s29, 1
        %s865 = scalar_select %p864, %s29, 1
        %p866 = scmp.lt.s32.totalorder %s30, 1
        %s867 = scalar_select %p866, %s30, 1
        %s868 = smul.addr %s867, 2
        %s869 = smul.addr %s865, 4
        %s870 = sadd.s32 %s868, %s869
        %s871 = smul.addr %s870, 8
        %s872 = scalar_lea.vmem %s5, %s871
        %p873 = scmp.lt.s32.totalorder %s29, 1
        %s874 = scalar_select %p873, %s29, 1
        %p875 = scmp.lt.s32.totalorder %s30, 1
        %s876 = scalar_select %p875, %s30, 1
        %s877 = smul.addr %s876, 2
        %s878 = smul.addr %s874, 4
        %s879 = sadd.s32 %s877, %s878
        %s880 = smul.addr %s879, 8
        %s881 = scalar_lea.vmem %s6, %s880
        // Predicated region
        $region53: #{_ccs_loss_call.1} parent=39 // pred_check
          %p882 = pneg %p206
        $region54: #{_ccs_loss_call.1} parent=39 // pred_check_branch
          %884 = sbr.rel (%p882) target = $region56
        $region55: #{_ccs_loss_call.1} parent=39 // pred_region
          _
        $region56: #{_ccs_loss_call.1} parent=39 // pred_fallthru
          _
        // Predicated region
        $region57: #{_ccs_loss_call.1} parent=39 // pred_check
          %p885 = pneg %p234
        $region58: #{_ccs_loss_call.1} parent=39 // pred_check_branch
          %887 = sbr.rel (%p885) target = $region60
        $region59: #{_ccs_loss_call.1} parent=39 // pred_region
          _
        $region60: #{_ccs_loss_call.1} parent=39 // pred_fallthru
          _
      $region40: #{_ccs_loss_call.1} parent=5 // pred_fallthru
        _
      %p888 = scmp.le.s32.totalorder 2, %s19
      // Predicated region
      $region61: #{_ccs_loss_call.1} parent=5 // pred_check
        %p889 = pneg %p888
      $region62: #{_ccs_loss_call.1} parent=5 // pred_check_branch
        %891 = sbr.rel (%p889) target = $region64
      $region63: #{_ccs_loss_call.1} parent=5 // pred_region
        %s892 = ssub.s32 %s19, 2
        // Predicated region
        $region65: #{_ccs_loss_call.1} parent=63 // pred_check
          %p893 = pneg %p212
        $region66: #{_ccs_loss_call.1} parent=63 // pred_check_branch
          %895 = sbr.rel (%p893) target = $region68
        $region67: #{_ccs_loss_call.1} parent=63 // pred_region
          %p896 = scmp.lt.s32.totalorder %s32, 1
          %s897 = scalar_select %p896, %s32, 1
          %p898 = scmp.lt.s32.totalorder %s33, 1
          %s899 = scalar_select %p898, %s33, 1
          %s900 = smul.addr %s899, 2
          %s901 = smul.addr %s897, 4
          %s902 = sadd.s32 %s900, %s901
          %s903 = smul.addr %s902, 8
          %s904 = scalar_lea.vmem %s5, %s903
        $region68: #{_ccs_loss_call.1} parent=63 // pred_fallthru
          _
        // Predicated region
        $region69: #{_ccs_loss_call.1} parent=63 // pred_check
          %p905 = pneg %p240
        $region70: #{_ccs_loss_call.1} parent=63 // pred_check_branch
          %907 = sbr.rel (%p905) target = $region72
        $region71: #{_ccs_loss_call.1} parent=63 // pred_region
          %p908 = scmp.lt.s32.totalorder %s32, 1
          %s909 = scalar_select %p908, %s32, 1
          %p910 = scmp.lt.s32.totalorder %s33, 1
          %s911 = scalar_select %p910, %s33, 1
          %s912 = smul.addr %s911, 2
          %s913 = smul.addr %s909, 4
          %s914 = sadd.s32 %s912, %s913
          %s915 = smul.addr %s914, 8
          %s916 = scalar_lea.vmem %s6, %s915
        $region72: #{_ccs_loss_call.1} parent=63 // pred_fallthru
          _
      $region64: #{_ccs_loss_call.1} parent=5 // pred_fallthru
        _
    $region6: #{_ccs_loss_call.1} parent=1 // loop_footer
      %s23 = sadd.s32 1, %s19
    $region7: #{_ccs_loss_call.1} parent=1 // loop_footer_branch
      %18 = sbr.rel target = $region3
    $region8: #{_ccs_loss_call.1} parent=1 // loop_exit
      _
    %917 = vsyncpa [#allocation3], 1
    %s918 = scalar_lea.sflag [#allocation3], 1
    %919 = vsyncpa %s918, 1
    %920 = vsyncpa [#allocation5], 1
    %s921 = scalar_lea.sflag [#allocation5], 1
    %922 = vsyncpa %s921, 1

</llo_original>
